<compile_context>
chip_gen: v7x
topology: tpu7x:2x2x1
jax: 0.10.0
libtpu: 0.0.40
codegen_flags: <defaults>
</compile_context>

<pallas_src>
import functools

import jax
import jax.numpy as jnp
from jax import lax
from jax.experimental import pallas as pl
from jax.experimental.pallas import tpu as pltpu


def _cdiv(a, b):
    return -(-a // b)


def _propagation_kernel(wid_ref, x_ref, o_ref, *, H, W):
    # wid_ref : (1, HW)        int32, column index (p mod W) of every flat position
    # x_ref   : (d_tile, HW)   input slab for the current (n, d-tile)
    # o_ref   : (5, d_tile, HW) the 5 clamped-shift channels
    x = x_ref[...]
    HW = H * W

    w_ids = wid_ref[...]                                   # (1, HW)
    p_idx = lax.broadcasted_iota(jnp.int32, (1, HW), 1)    # flat position
    is_w0 = w_ids == 0
    is_wlast = w_ids == (W - 1)
    is_h0 = p_idx < W
    is_hlast = p_idx >= (H - 1) * W

    def roll_flat(a, s):
        # result[p] = a[(p - s) mod HW]  (same convention as jnp.roll)
        return pltpu.roll(a, shift=s % HW, axis=1)

    # Horizontal (W) shifts with replication clamp at the row edges.
    left = jnp.where(is_w0, x, roll_flat(x, 1))            # x[h, clamp(w-1)]
    right = jnp.where(is_wlast, x, roll_flat(x, -1))       # x[h, clamp(w+1)]

    # Vertical (H) shifts: roll by +-W on the flat axis, clamp top/bottom rows.
    o_ref[1] = x                                                     # (h  , w  )
    o_ref[0] = jnp.where(is_h0, left, roll_flat(left, W))            # (h-1, w-1)
    o_ref[3] = jnp.where(is_hlast, left, roll_flat(left, -W))        # (h+1, w-1)
    o_ref[2] = jnp.where(is_hlast, right, roll_flat(right, -W))      # (h+1, w+1)
    o_ref[4] = jnp.where(is_h0, right, roll_flat(right, W))          # (h-1, w+1)


def _pick_d_tile(N, D, HW, budget_bytes):
    lanes = _cdiv(HW, 128) * 128                # lane-padded last dim
    bytes_per_d = 2 * (1 + 5) * lanes * 4       # double-buffered in + out, f32
    max_dt = max(1, budget_bytes // bytes_per_d)
    if D <= max_dt:
        d_tile = D                              # block == full dim (no 8-alignment needed)
    else:
        # keep the (second-to-last) sublane dim 8-aligned; ragged last block is OK
        d_tile = min(D, max(8, (max_dt // 8) * 8))
    # v7x has 2 TensorCores sharing the "parallel" grid axes: avoid a 1-step grid.
    if N * _cdiv(D, d_tile) < 2 and D > 8:
        d_tile = min(d_tile, 8 * _cdiv(_cdiv(D, 2), 8))
    return d_tile


def propagation_prob(prob_volume):
    """(N, 1, D, H, W) -> (N, 5, D, H, W): 5 replication-clamped spatial shifts."""
    N, C, D, H, W = prob_volume.shape
    assert C == 1, "conv3d filter has in_channels=1"
    HW = H * W
    dtype = prob_volume.dtype

    # Generation-aware VMEM budget (v7x: 64 MiB physical; v5e/v6e: 128 MiB).
    try:
        info = pltpu.get_tpu_info()
    except Exception:
        info = None
    vmem_cap = getattr(info, "vmem_capacity_bytes", None) if info is not None else None
    if not vmem_cap:
        vmem_cap = 64 * 1024 * 1024             # conservative v7x floor
    vmem_cap = int(vmem_cap)

    d_tile = _pick_d_tile(N, D, HW, vmem_cap // 4)
    d_tiles = _cdiv(D, d_tile)

    # Layout-padded, double-buffered I/O block footprint; leave slack for the
    # handful of slab-sized temporaries (left/right and the rolled taps).
    lanes = _cdiv(HW, 128) * 128
    subl = _cdiv(d_tile, 8) * 8
    block_bytes = 2 * (1 + 5) * subl * lanes * 4
    vmem_limit = min(vmem_cap, max(vmem_cap // 2, 2 * block_bytes))
    # TODO(synk): tile the flattened HW axis as well if a single depth slice
    # (6 * HW * 4 B, double-buffered) ever exceeds the per-generation VMEM budget.

    x_flat = prob_volume.reshape(N, D, HW)
    w_ids = (jnp.arange(HW, dtype=jnp.int32) % W).reshape(1, HW)

    kernel = functools.partial(_propagation_kernel, H=H, W=W)
    out_flat = pl.pallas_call(
        kernel,
        out_shape=jax.ShapeDtypeStruct((N, 5, D, HW), dtype),
        grid=(N, d_tiles),
        in_specs=[
            pl.BlockSpec((1, HW), lambda n, dt: (0, 0)),
            pl.BlockSpec((None, d_tile, HW), lambda n, dt: (n, dt, 0)),
        ],
        out_specs=pl.BlockSpec((None, 5, d_tile, HW), lambda n, dt: (n, 0, dt, 0)),
        compiler_params=pltpu.CompilerParams(
            dimension_semantics=("parallel", "parallel"),
            vmem_limit_bytes=int(vmem_limit),
        ),
    )(w_ids, x_flat)
    return out_flat.reshape(N, 5, D, H, W)


def _reference(prob_volume):
    # Independent literal transcription of the PyTorch module: edge-pad (H, W)
    # by 1, then cross-correlate (F.conv3d) with the static one-hot filter.
    filt = jnp.zeros((5, 1, 1, 3, 3), jnp.float32)
    filt = filt.at[0, 0, 0, 0, 0].set(1.0)
    filt = filt.at[1, 0, 0, 1, 1].set(1.0)
    filt = filt.at[2, 0, 0, 2, 2].set(1.0)
    filt = filt.at[3, 0, 0, 2, 0].set(1.0)
    filt = filt.at[4, 0, 0, 0, 2].set(1.0)
    padded = jnp.pad(prob_volume, ((0, 0), (0, 0), (0, 0), (1, 1), (1, 1)),
                     mode="edge")
    return lax.conv_general_dilated(
        padded, filt, window_strides=(1, 1, 1), padding="VALID",
        dimension_numbers=("NCDHW", "OIDHW", "NCDHW"))


if __name__ == "__main__":
    key = jax.random.PRNGKey(0)
    N, C, D, H, W = 2, 1, 8, 16, 16
    prob_volume = jax.random.uniform(key, (N, C, D, H, W), dtype=jnp.float32)

    out = jax.block_until_ready(propagation_prob(prob_volume))
    ref = jax.block_until_ready(_reference(prob_volume))

    assert out.shape == (N, 5, D, H, W)
    assert jnp.allclose(out, ref, atol=1e-6), "mismatch vs conv3d reference"

    print("KERNEL_OK")
</pallas_src>

<mosaic_0001>
module attributes {stable_mosaic.version = 11 : i64} {
  func.func @_propagation_kernel(%arg0: i32, %arg1: i32, %arg2: memref<1x256xi32, #tpu.memory_space<vmem>>, %arg3: memref<1x8x256xf32, #tpu.memory_space<vmem>>, %arg4: memref<1x5x8x256xf32, #tpu.memory_space<vmem>>) attributes {dimension_semantics = [#tpu.dimension_semantics<parallel>, #tpu.dimension_semantics<parallel>], iteration_bounds = array<i64: 2, 1>, scalar_prefetch = 0 : i64, scratch_operands = 0 : i64, tpu.core_type = #tpu.core_type<tc>, window_params = [{pipeline_mode = #tpu.pipeline_mode<synchronous>, transform_indices = @transform_0, window_bounds = array<i64: 1, 256>}, {transform_indices = @transform_1, window_bounds = array<i64: 1, 8, 256>}, {transform_indices = @transform_2, window_bounds = array<i64: 1, 5, 8, 256>}]} {
    %c0 = arith.constant 0 : index
    %c0_0 = arith.constant 0 : index
    %c0_1 = arith.constant 0 : index
    %0 = vector.load %arg3[%c0, %c0_0, %c0_1] : memref<1x8x256xf32, #tpu.memory_space<vmem>>, vector<1x8x256xf32>
    %1 = vector.shape_cast %0 : vector<1x8x256xf32> to vector<8x256xf32>
    %c0_2 = arith.constant 0 : index
    %c0_3 = arith.constant 0 : index
    %2 = vector.load %arg2[%c0_2, %c0_3] : memref<1x256xi32, #tpu.memory_space<vmem>>, vector<1x256xi32>
    %3 = tpu.iota {dimensions = array<i32: 1>} : vector<1x256xi32>
    %c0_i32 = arith.constant 0 : i32
    %4 = vector.broadcast %c0_i32 : i32 to vector<1x256xi32>
    %5 = arith.cmpi eq, %2, %4 : vector<1x256xi32>
    %c15_i32 = arith.constant 15 : i32
    %6 = vector.broadcast %c15_i32 : i32 to vector<1x256xi32>
    %7 = arith.cmpi eq, %2, %6 : vector<1x256xi32>
    %c16_i32 = arith.constant 16 : i32
    %8 = vector.broadcast %c16_i32 : i32 to vector<1x256xi32>
    %9 = arith.cmpi slt, %3, %8 : vector<1x256xi32>
    %c240_i32 = arith.constant 240 : i32
    %10 = vector.broadcast %c240_i32 : i32 to vector<1x256xi32>
    %11 = arith.cmpi sge, %3, %10 : vector<1x256xi32>
    %c1_i32 = arith.constant 1 : i32
    %12 = tpu.dynamic_rotate %1 by %c1_i32 dim 1 : vector<8x256xf32>, i32 -> vector<8x256xf32>
    %13 = vector.shape_cast %5 : vector<1x256xi1> to vector<1x256xi1>
    %14 = vector.broadcast %13 : vector<1x256xi1> to vector<8x256xi1>
    %15 = arith.select %14, %1, %12 : vector<8x256xi1>, vector<8x256xf32>
    %c255_i32 = arith.constant 255 : i32
    %16 = tpu.dynamic_rotate %1 by %c255_i32 dim 1 : vector<8x256xf32>, i32 -> vector<8x256xf32>
    %17 = vector.shape_cast %7 : vector<1x256xi1> to vector<1x256xi1>
    %18 = vector.broadcast %17 : vector<1x256xi1> to vector<8x256xi1>
    %19 = arith.select %18, %1, %16 : vector<8x256xi1>, vector<8x256xf32>
    %c0_4 = arith.constant 0 : index
    %c1 = arith.constant 1 : index
    %c0_5 = arith.constant 0 : index
    %c0_6 = arith.constant 0 : index
    %20 = vector.load %arg4[%c0_4, %c1, %c0_5, %c0_6] : memref<1x5x8x256xf32, #tpu.memory_space<vmem>>, vector<1x1x8x256xf32>
    %21 = vector.shape_cast %20 : vector<1x1x8x256xf32> to vector<8x256xf32>
    %22 = vector.shape_cast %1 : vector<8x256xf32> to vector<1x1x8x256xf32>
    tpu.vector_store %arg4[%c0_4, %c1, %c0_5, %c0_6], %22 {strides = array<i32>} : memref<1x5x8x256xf32, #tpu.memory_space<vmem>>, vector<1x1x8x256xf32>,
    %c16_i32_7 = arith.constant 16 : i32
    %23 = tpu.dynamic_rotate %15 by %c16_i32_7 dim 1 : vector<8x256xf32>, i32 -> vector<8x256xf32>
    %24 = vector.shape_cast %9 : vector<1x256xi1> to vector<1x256xi1>
    %25 = vector.broadcast %24 : vector<1x256xi1> to vector<8x256xi1>
    %26 = arith.select %25, %15, %23 : vector<8x256xi1>, vector<8x256xf32>
    %c0_8 = arith.constant 0 : index
    %c0_9 = arith.constant 0 : index
    %c0_10 = arith.constant 0 : index
    %c0_11 = arith.constant 0 : index
    %27 = vector.load %arg4[%c0_8, %c0_9, %c0_10, %c0_11] : memref<1x5x8x256xf32, #tpu.memory_space<vmem>>, vector<1x1x8x256xf32>
    %28 = vector.shape_cast %27 : vector<1x1x8x256xf32> to vector<8x256xf32>
    %29 = vector.shape_cast %26 : vector<8x256xf32> to vector<1x1x8x256xf32>
    tpu.vector_store %arg4[%c0_8, %c0_9, %c0_10, %c0_11], %29 {strides = array<i32>} : memref<1x5x8x256xf32, #tpu.memory_space<vmem>>, vector<1x1x8x256xf32>,
    %c240_i32_12 = arith.constant 240 : i32
    %30 = tpu.dynamic_rotate %15 by %c240_i32_12 dim 1 : vector<8x256xf32>, i32 -> vector<8x256xf32>
    %31 = vector.shape_cast %11 : vector<1x256xi1> to vector<1x256xi1>
    %32 = vector.broadcast %31 : vector<1x256xi1> to vector<8x256xi1>
    %33 = arith.select %32, %15, %30 : vector<8x256xi1>, vector<8x256xf32>
    %c0_13 = arith.constant 0 : index
    %c3 = arith.constant 3 : index
    %c0_14 = arith.constant 0 : index
    %c0_15 = arith.constant 0 : index
    %34 = vector.load %arg4[%c0_13, %c3, %c0_14, %c0_15] : memref<1x5x8x256xf32, #tpu.memory_space<vmem>>, vector<1x1x8x256xf32>
    %35 = vector.shape_cast %34 : vector<1x1x8x256xf32> to vector<8x256xf32>
    %36 = vector.shape_cast %33 : vector<8x256xf32> to vector<1x1x8x256xf32>
    tpu.vector_store %arg4[%c0_13, %c3, %c0_14, %c0_15], %36 {strides = array<i32>} : memref<1x5x8x256xf32, #tpu.memory_space<vmem>>, vector<1x1x8x256xf32>,
    %c240_i32_16 = arith.constant 240 : i32
    %37 = tpu.dynamic_rotate %19 by %c240_i32_16 dim 1 : vector<8x256xf32>, i32 -> vector<8x256xf32>
    %38 = vector.shape_cast %11 : vector<1x256xi1> to vector<1x256xi1>
    %39 = vector.broadcast %38 : vector<1x256xi1> to vector<8x256xi1>
    %40 = arith.select %39, %19, %37 : vector<8x256xi1>, vector<8x256xf32>
    %c0_17 = arith.constant 0 : index
    %c2 = arith.constant 2 : index
    %c0_18 = arith.constant 0 : index
    %c0_19 = arith.constant 0 : index
    %41 = vector.load %arg4[%c0_17, %c2, %c0_18, %c0_19] : memref<1x5x8x256xf32, #tpu.memory_space<vmem>>, vector<1x1x8x256xf32>
    %42 = vector.shape_cast %41 : vector<1x1x8x256xf32> to vector<8x256xf32>
    %43 = vector.shape_cast %40 : vector<8x256xf32> to vector<1x1x8x256xf32>
    tpu.vector_store %arg4[%c0_17, %c2, %c0_18, %c0_19], %43 {strides = array<i32>} : memref<1x5x8x256xf32, #tpu.memory_space<vmem>>, vector<1x1x8x256xf32>,
    %c16_i32_20 = arith.constant 16 : i32
    %44 = tpu.dynamic_rotate %19 by %c16_i32_20 dim 1 : vector<8x256xf32>, i32 -> vector<8x256xf32>
    %45 = vector.shape_cast %9 : vector<1x256xi1> to vector<1x256xi1>
    %46 = vector.broadcast %45 : vector<1x256xi1> to vector<8x256xi1>
    %47 = arith.select %46, %19, %44 : vector<8x256xi1>, vector<8x256xf32>
    %c0_21 = arith.constant 0 : index
    %c4 = arith.constant 4 : index
    %c0_22 = arith.constant 0 : index
    %c0_23 = arith.constant 0 : index
    %48 = vector.load %arg4[%c0_21, %c4, %c0_22, %c0_23] : memref<1x5x8x256xf32, #tpu.memory_space<vmem>>, vector<1x1x8x256xf32>
    %49 = vector.shape_cast %48 : vector<1x1x8x256xf32> to vector<8x256xf32>
    %50 = vector.shape_cast %47 : vector<8x256xf32> to vector<1x1x8x256xf32>
    tpu.vector_store %arg4[%c0_21, %c4, %c0_22, %c0_23], %50 {strides = array<i32>} : memref<1x5x8x256xf32, #tpu.memory_space<vmem>>, vector<1x1x8x256xf32>,
    return
  }
  func.func @transform_0(%arg0: i32, %arg1: i32) -> (i32, i32) {
    %c0_i32 = arith.constant 0 : i32
    %c0_i32_0 = arith.constant 0 : i32
    %c0_i32_1 = arith.constant 0 : i32
    return %c0_i32, %c0_i32_0 : i32, i32
  }
  func.func @transform_1(%arg0: i32, %arg1: i32) -> (i32, i32, i32) {
    %c0_i32 = arith.constant 0 : i32
    %c0_i32_0 = arith.constant 0 : i32
    return %arg0, %arg1, %c0_i32 : i32, i32, i32
  }
  func.func @transform_2(%arg0: i32, %arg1: i32) -> (i32, i32, i32, i32) {
    %c0_i32 = arith.constant 0 : i32
    %c0_i32_0 = arith.constant 0 : i32
    %c0_i32_1 = arith.constant 0 : i32
    return %arg0, %c0_i32, %arg1, %c0_i32_0 : i32, i32, i32, i32
  }
}

</mosaic_0001>

<llo_original>
// kernel: tpu_custom_call.1
$region0: #{tpu_custom_call.1}
  #allocation0 [shape = 'u32[]', space=smem, size = 0x4, offset = 0x4, fixed_abs, tag = 'smem constant byte address 0x4 - core index']
  #allocation1 [shape = 'u32[144,128]{1,0:T(1,128)}', space=vmem, size = 0x12000, scoped, tag = 'internal scratch']
  %s0 = inlined_call_operand.hbm [shape: s32[1,256], index: 0, kind: input, shape index: {}]
  %s1 = inlined_call_operand.hbm [shape: f32[2,8,256], index: 1, kind: input, shape index: {}]
  %s2 = inlined_call_operand.hbm [shape: f32[2,5,8,256], index: 2, kind: output, shape index: {}]
  %s3 = sld [smem:[#allocation0]]
  $region49: #{tpu_custom_call.1} parent=0
    _
  %s5 = ssub.s32 1, %s3
  %s6 = scalar_select 0, %s5, %s3
  $region1: #{tpu_custom_call.1} parent=0
    #allocation2 [shape = 'u8[1024]{0}', space=vmem, size = 0x400, scoped, tag = 'input window, operand 0, single buffered']
    #allocation3 [shape = 's32[2]{0}', space=sflag, size = 0x8, scoped, tag = 'scoped memory for tpu_custom_call.1']
    #allocation4 [shape = 's32[2]{0}', space=sflag, size = 0x8, scoped, tag = 'scoped memory for tpu_custom_call.1']
    #allocation5 [shape = 'u8[16384]{0}', space=vmem, size = 0x4000, scoped, tag = 'input window, operand 1']
    #allocation6 [shape = 's32[2]{0}', space=sflag, size = 0x8, scoped, tag = 'scoped memory for tpu_custom_call.1']
    #allocation7 [shape = 'u8[81920]{0}', space=vmem, size = 0x14000, scoped, tag = 'output window, operand 0']
    %7 = vsyncpa [#allocation3], 0
    %8 = vsyncpa [#allocation6], 0
    %s9 = scalar_lea.sflag [#allocation6], 1
    %10 = vsyncpa %s9, 0
    %11 = vsyncpa [#allocation4], 0
    %s12 = scalar_lea.sflag [#allocation4], 1
    %13 = vsyncpa %s12, 0
    loop: start=0, step=1, limit=4
    $region2: #{tpu_custom_call.1} parent=1 // loop_pre_header
      _
    $region3: #{tpu_custom_call.1} parent=1 // loop_header
      %s15 = sphi 0, %s19
      %p16 = scmp.ge.s32.totalorder %s15, 4
      %s22 = sphi 0, %s34
      %s23 = sphi 0, %s30
      %s24 = sphi 0, %s22
      %s25 = sphi 0, %s23
      %s26 = sphi 0, %s24
      %s27 = sphi 0, %s25
      %s35 = sphi 0, %s35
      %s37 = sphi 0, %s35
      %s38 = sphi 0, %s37
      %s52 = sphi 0, %s38
      %s60 = sphi 0, %s62
      %s63 = sphi 0, %s60
      %s64 = sphi 0, %s63
      %s80 = sphi 0, %s64
      %s88 = sphi 0, %s90
      %s91 = sphi 0, %s88
      %s92 = sphi 0, %s91
      %s108 = sphi 0, %s92
    $region4: #{tpu_custom_call.1} parent=1 // loop_header_branch
      %18 = sbr.rel (%p16) target = $region8
    $region5: #{tpu_custom_call.1} parent=1 // loop_body
      %s20 = ssub.s32 %s15, 1
      %s21 = ssub.s32 %s15, 2
      %s28 = sadd.s32 1, %s23
      %p29 = scmp.ge.s32.totalorder %s28, 1
      %s30 = scalar_select %p29, 0, %s28
      %s31 = sadd.s32 1, %s22
      %s32 = scalar_select %p29, %s31, %s22
      %p33 = scmp.ge.s32.totalorder %s32, 2
      %s34 = scalar_select %p33, 0, %s32
      %s36 = sadd.s32 %s35, 1
      %p39 = scmp.eq.s32.totalorder %s15, 1
      %p40 = scmp.ne.s32.totalorder %s35, %s37
      %p41 = scmp.eq.s32.totalorder %s15, 0
      %p42 = por %p40, %p41
      %p43 = scmp.ne.s32.totalorder %s35, %s37
      %p44 = scmp.eq.s32.totalorder %s20, 1
      %p45 = por %p43, %p44
      %p46 = scmp.ne.s32.totalorder %s37, %s38
      %p47 = scmp.eq.s32.totalorder %s20, 0
      %p48 = por %p46, %p47
      %p49 = scmp.ne.s32.totalorder %s37, %s38
      %p50 = scmp.eq.s32.totalorder %s21, 1
      %p51 = por %p49, %p50
      %p53 = scmp.ne.s32.totalorder %s38, %s52
      %p54 = scmp.eq.s32.totalorder %s21, 0
      %p55 = por %p53, %p54
      %s56 = ssub.s32 %s22, %s34
      %s57 = ssub.s32 %s23, %s30
      %s58 = sor.u32 %s56, %s57
      %p59 = scmp.eq.s32.totalorder %s58, 0
      %s61 = sadd.s32 %s60, 1
      %s62 = scalar_select %p59, %s60, %s61
      %p65 = pneg %p59
      %p66 = scmp.eq.s32.totalorder %s15, 1
      %p67 = por %p65, %p66
      %p68 = scmp.ne.s32.totalorder %s60, %s63
      %p69 = scmp.eq.s32.totalorder %s15, 0
      %p70 = por %p68, %p69
      %p71 = scmp.ne.s32.totalorder %s60, %s63
      %p72 = scmp.eq.s32.totalorder %s20, 1
      %p73 = por %p71, %p72
      %p74 = scmp.ne.s32.totalorder %s63, %s64
      %p75 = scmp.eq.s32.totalorder %s20, 0
      %p76 = por %p74, %p75
      %p77 = scmp.ne.s32.totalorder %s63, %s64
      %p78 = scmp.eq.s32.totalorder %s21, 1
      %p79 = por %p77, %p78
      %p81 = scmp.ne.s32.totalorder %s64, %s80
      %p82 = scmp.eq.s32.totalorder %s21, 0
      %p83 = por %p81, %p82
      %s84 = ssub.s32 %s22, %s34
      %s85 = ssub.s32 %s23, %s30
      %s86 = sor.u32 %s84, %s85
      %p87 = scmp.eq.s32.totalorder %s86, 0
      %s89 = sadd.s32 %s88, 1
      %s90 = scalar_select %p87, %s88, %s89
      %p93 = pneg %p87
      %p94 = scmp.eq.s32.totalorder %s15, 1
      %p95 = por %p93, %p94
      %p96 = scmp.ne.s32.totalorder %s88, %s91
      %p97 = scmp.eq.s32.totalorder %s15, 0
      %p98 = por %p96, %p97
      %p99 = scmp.ne.s32.totalorder %s88, %s91
      %p100 = scmp.eq.s32.totalorder %s20, 1
      %p101 = por %p99, %p100
      %p102 = scmp.ne.s32.totalorder %s91, %s92
      %p103 = scmp.eq.s32.totalorder %s20, 0
      %p104 = por %p102, %p103
      %p105 = scmp.ne.s32.totalorder %s91, %s92
      %p106 = scmp.eq.s32.totalorder %s21, 1
      %p107 = por %p105, %p106
      %p109 = scmp.ne.s32.totalorder %s92, %s108
      %p110 = scmp.eq.s32.totalorder %s21, 0
      %p111 = por %p109, %p110
      %p112 = scmp.le.s32.totalorder 1, %s15
      %p113 = scmp.lt.s32.totalorder %s15, 3
      %p114 = pnand %p112, %p113
      %p115 = pneg %p114
      // Predicated region
      $region9: #{tpu_custom_call.1} parent=5 // pred_check
        _
      $region10: #{tpu_custom_call.1} parent=5 // pred_check_branch
        %117 = sbr.rel (%p114) target = $region12
      $region11: #{tpu_custom_call.1} parent=5 // pred_region
        %s118 = ssub.s32 %s15, 1
        // Predicated region
        $region13: #{tpu_custom_call.1} parent=11 // pred_check
          %p119 = pneg %p48
        $region14: #{tpu_custom_call.1} parent=11 // pred_check_branch
          %121 = sbr.rel (%p119) target = $region16
        $region15: #{tpu_custom_call.1} parent=11 // pred_region
          %s123 = ssub.s32 32, 32
          %124 = vsyncadd [#allocation3], %s123
          %s126 = sshll.u32 [#allocation2], 4
          %s127 = int_to_ptr.vmem [resolvable:$true] %s126
          %129 = dma.hbm_to_vmem [thread:$0]  %s0, 32, %s127, [#allocation3]
        $region16: #{tpu_custom_call.1} parent=11 // pred_fallthru
          _
      $region12: #{tpu_custom_call.1} parent=5 // pred_fallthru
        _
      %p130 = scmp.lt.s32.totalorder %s15, 2
      // Predicated region
      $region17: #{tpu_custom_call.1} parent=5 // pred_check
        %p131 = pneg %p130
      $region18: #{tpu_custom_call.1} parent=5 // pred_check_branch
        %133 = sbr.rel (%p131) target = $region20
      $region19: #{tpu_custom_call.1} parent=5 // pred_region
        // Predicated region
        $region21: #{tpu_custom_call.1} parent=19 // pred_check
          %p134 = pneg %p70
        $region22: #{tpu_custom_call.1} parent=19 // pred_check_branch
          %136 = sbr.rel (%p134) target = $region24
        $region23: #{tpu_custom_call.1} parent=19 // pred_region
          %s137 = sand.u32 %s60, 1
          %s138 = scalar_lea.sflag [#allocation6], %s137
          %s139 = sand.u32 %s60, 1
          %s140 = smul.addr %s139, 16
          %s141 = scalar_lea.vmem [#allocation5], %s140
          %s143 = ssub.s32 256, 256
          %144 = vsyncadd %s138, %s143
          %s145 = smul.addr %s23, 2
          %s146 = smul.addr %s22, 2
          %s147 = sadd.s32 %s145, %s146
          %s148 = smul.addr %s147, 128
          %s149 = scalar_lea.hbm %s1, %s148
          %s151 = sshll.u32 %s141, 4
          %s152 = int_to_ptr.vmem [resolvable:$true] %s151
          %154 = dma.hbm_to_vmem [thread:$0]  %s149, 256, %s152, %s138
        $region24: #{tpu_custom_call.1} parent=19 // pred_fallthru
          _
      $region20: #{tpu_custom_call.1} parent=5 // pred_fallthru
        _
      %p155 = scmp.le.s32.totalorder 1, %s15
      %p156 = scmp.lt.s32.totalorder %s15, 3
      %p157 = pnand %p155, %p156
      %p158 = pneg %p157
      // Predicated region
      $region25: #{tpu_custom_call.1} parent=5 // pred_check
        _
      $region26: #{tpu_custom_call.1} parent=5 // pred_check_branch
        %160 = sbr.rel (%p157) target = $region28
      $region27: #{tpu_custom_call.1} parent=5 // pred_region
        %s161 = ssub.s32 %s15, 1
        // Predicated region
        $region29: #{tpu_custom_call.1} parent=27 // pred_check
          %p162 = pneg %p48
        $region30: #{tpu_custom_call.1} parent=27 // pred_check_branch
          %164 = sbr.rel (%p162) target = $region32
        $region31: #{tpu_custom_call.1} parent=27 // pred_region
          %165 = dma.done [#allocation3], 32
        $region32: #{tpu_custom_call.1} parent=27 // pred_fallthru
          _
        %s166 = sand.u32 %s63, 1
        %s167 = scalar_lea.sflag [#allocation6], %s166
        %s168 = sand.u32 %s63, 1
        %s169 = smul.addr %s168, 16
        %s170 = scalar_lea.vmem [#allocation5], %s169
        // Predicated region
        $region33: #{tpu_custom_call.1} parent=27 // pred_check
          %p171 = pneg %p76
        $region34: #{tpu_custom_call.1} parent=27 // pred_check_branch
          %173 = sbr.rel (%p171) target = $region36
        $region35: #{tpu_custom_call.1} parent=27 // pred_region
          %174 = dma.done %s167, 256
        $region36: #{tpu_custom_call.1} parent=27 // pred_fallthru
          _
        %p175 = pneg %p48
        %p176 = pneg %p45
        %s177 = sand.u32 %s63, 1
        %s178 = scalar_lea.sflag [#allocation6], %s177
        %s179 = sand.u32 %s63, 1
        %s180 = smul.addr %s179, 16
        %s181 = scalar_lea.vmem [#allocation5], %s180
        %p182 = pneg %p76
        %p183 = pneg %p73
        %p184 = pneg %p104
        %p185 = pneg %p101
        %s186 = sand.u32 %s91, 1
        %s187 = scalar_lea.sflag [#allocation4], %s186
        %s188 = sand.u32 %s91, 1
        %s189 = smul.addr %s188, 80
        %s190 = scalar_lea.vmem [#allocation7], %s189
        %v191 = vld [vmem:[%s170] sm:$0xff]
        %v192 = vld [vmem:[%s170 + $0x8] sm:$0xff]
        %v193 = vld [vmem:[#allocation2] sm:$0x3]
        %v194 = vlaneseq
        %v195 = vand.u32 %v194, 127
        %v196 = vadd.s32 %v195, 128
        %vm197 = vcmp.eq.s32.totalorder %v193, 0
        %vm198 = vcmp.eq.s32.totalorder %v193, 15
        %vm199 = vcmp.lt.s32.totalorder %v195, 16
        %vm200 = vcmp.lt.s32.totalorder %v196, 16
        %vm201 = vcmp.ge.s32.totalorder %v195, 240
        %vm202 = vcmp.ge.s32.totalorder %v196, 240
        %203 = vrot.lane.b32.xlu0 %v191, 1
        %v204 = vpop.permute.xlu0 %203
        %205 = vrot.lane.b32.xlu0 %v192, 1
        %v206 = vpop.permute.xlu0 %205
        %vm207 = vcmp.lt.s32.totalorder %v195, 1
        %v208 = vsel %vm207, %v204, %v206
        %v209 = vsel %vm207, %v206, %v204
        %v210 = vsel %vm197, 1, 0
        %v211 = vlaneseq
        %v212 = vshrl.u32 %v211, 7
        %v213 = vsub.s32 0, %v212
        %v214 = vrot.slane %v210, %v213
        %v215 = vlaneseq
        %v216 = vshrl.u32 %v215, 7
        %v217 = vsub.s32 1, %v216
        %v218 = vrot.slane %v210, %v217
        %vm219 = vcmp.eq.s32.totalorder %v214, 1
        %vm220 = vcmp.eq.s32.totalorder %v218, 1
        %v221 = vsel %vm219, %v191, %v209
        %v222 = vsel %vm220, %v192, %v208
        %223 = vrot.lane.b32.xlu0 %v191, 127
        %v224 = vpop.permute.xlu0 %223
        %225 = vrot.lane.b32.xlu0 %v192, 127
        %v226 = vpop.permute.xlu0 %225
        %vm227 = vcmp.lt.s32.totalorder %v195, 127
        %v228 = vsel %vm227, %v224, %v226
        %v229 = vsel %vm227, %v226, %v224
        %v230 = vsel %vm198, 1, 0
        %v231 = vlaneseq
        %v232 = vshrl.u32 %v231, 7
        %v233 = vsub.s32 0, %v232
        %v234 = vrot.slane %v230, %v233
        %v235 = vlaneseq
        %v236 = vshrl.u32 %v235, 7
        %v237 = vsub.s32 1, %v236
        %v238 = vrot.slane %v230, %v237
        %vm239 = vcmp.eq.s32.totalorder %v234, 1
        %vm240 = vcmp.eq.s32.totalorder %v238, 1
        %v241 = vsel %vm239, %v191, %v228
        %v242 = vsel %vm240, %v192, %v229
        %s243 = scalar_lea.vmem %s190, 16 [#allocation7]
        %244 = vst [vmem:[%s243] sm:$0xff] %v191
        %245 = vst [vmem:[%s243 + $0x8] sm:$0xff] %v192
        %246 = vrot.lane.b32.xlu0 %v221, 16
        %v247 = vpop.permute.xlu0 %246
        %248 = vrot.lane.b32.xlu0 %v222, 16
        %v249 = vpop.permute.xlu0 %248
        %v250 = vsel %vm199, %v247, %v249
        %v251 = vsel %vm199, %v249, %v247
        %v252 = vsel %vm199, 1, 0
        %v253 = vsel %vm200, 1, 0
        %vm254 = vcmp.eq.s32.totalorder %v252, 1
        %vm255 = vcmp.eq.s32.totalorder %v253, 1
        %v256 = vsel %vm254, %v221, %v251
        %v257 = vsel %vm255, %v222, %v250
        %258 = vst [vmem:[%s190] sm:$0xff] %v256
        %259 = vst [vmem:[%s190 + $0x8] sm:$0xff] %v257
        %260 = vrot.lane.b32.xlu0 %v221, 112
        %v261 = vpop.permute.xlu0 %260
        %262 = vrot.lane.b32.xlu0 %v222, 112
        %v263 = vpop.permute.xlu0 %262
        %vm264 = vcmp.lt.s32.totalorder %v195, 112
        %v265 = vsel %vm264, %v261, %v263
        %v266 = vsel %vm264, %v263, %v261
        %v267 = vsel %vm201, 1, 0
        %v268 = vsel %vm202, 1, 0
        %vm269 = vcmp.eq.s32.totalorder %v267, 1
        %vm270 = vcmp.eq.s32.totalorder %v268, 1
        %v271 = vsel %vm269, %v221, %v265
        %v272 = vsel %vm270, %v222, %v266
        %s273 = scalar_lea.vmem %s190, 48 [#allocation7]
        %274 = vst [vmem:[%s273] sm:$0xff] %v271
        %275 = vst [vmem:[%s273 + $0x8] sm:$0xff] %v272
        %276 = vrot.lane.b32.xlu0 %v241, 112
        %v277 = vpop.permute.xlu0 %276
        %278 = vrot.lane.b32.xlu0 %v242, 112
        %v279 = vpop.permute.xlu0 %278
        %v280 = vsel %vm264, %v277, %v279
        %v281 = vsel %vm264, %v279, %v277
        %v282 = vsel %vm269, %v241, %v280
        %v283 = vsel %vm270, %v242, %v281
        %s284 = scalar_lea.vmem %s190, 32 [#allocation7]
        %285 = vst [vmem:[%s284] sm:$0xff] %v282
        %286 = vst [vmem:[%s284 + $0x8] sm:$0xff] %v283
        %287 = vrot.lane.b32.xlu0 %v241, 16
        %v288 = vpop.permute.xlu0 %287
        %289 = vrot.lane.b32.xlu0 %v242, 16
        %v290 = vpop.permute.xlu0 %289
        %v291 = vsel %vm199, %v288, %v290
        %v292 = vsel %vm199, %v290, %v288
        %v293 = vsel %vm254, %v241, %v292
        %v294 = vsel %vm255, %v242, %v291
        %s295 = scalar_lea.vmem %s190, 64 [#allocation7]
        %296 = vst [vmem:[%s295] sm:$0xff] %v293
        %297 = vst [vmem:[%s295 + $0x8] sm:$0xff] %v294
        %s298 = sand.u32 %s91, 1
        %s299 = scalar_lea.sflag [#allocation4], %s298
        %s300 = sand.u32 %s91, 1
        %s301 = smul.addr %s300, 80
        %s302 = scalar_lea.vmem [#allocation7], %s301
        // Predicated region
        $region37: #{tpu_custom_call.1} parent=27 // pred_check
          %p303 = pneg %p101
        $region38: #{tpu_custom_call.1} parent=27 // pred_check_branch
          %305 = sbr.rel (%p303) target = $region40
        $region39: #{tpu_custom_call.1} parent=27 // pred_region
          %s307 = ssub.s32 1280, 1280
          %308 = vsyncadd %s299, %s307
          %s309 = smul.addr %s25, 2
          %s310 = smul.addr %s24, 10
          %s311 = sadd.s32 %s309, %s310
          %s312 = smul.addr %s311, 128
          %s313 = scalar_lea.hbm %s2, %s312
          %s314 = sshll.u32 %s302, 4
          %s315 = int_to_ptr.vmem [resolvable:$true] %s314
          %320 = dma.vmem_to_hbm [thread:$0]  %s315, 1280, %s313, %s299, 256, 256, 16
        $region40: #{tpu_custom_call.1} parent=27 // pred_fallthru
          _
      $region28: #{tpu_custom_call.1} parent=5 // pred_fallthru
        _
      %p321 = scmp.le.s32.totalorder 2, %s15
      // Predicated region
      $region41: #{tpu_custom_call.1} parent=5 // pred_check
        %p322 = pneg %p321
      $region42: #{tpu_custom_call.1} parent=5 // pred_check_branch
        %324 = sbr.rel (%p322) target = $region44
      $region43: #{tpu_custom_call.1} parent=5 // pred_region
        %s325 = ssub.s32 %s15, 2
        // Predicated region
        $region45: #{tpu_custom_call.1} parent=43 // pred_check
          %p326 = pneg %p107
        $region46: #{tpu_custom_call.1} parent=43 // pred_check_branch
          %328 = sbr.rel (%p326) target = $region48
        $region47: #{tpu_custom_call.1} parent=43 // pred_region
          %s329 = sand.u32 %s92, 1
          %s330 = scalar_lea.sflag [#allocation4], %s329
          %s331 = sand.u32 %s92, 1
          %s332 = smul.addr %s331, 80
          %s333 = scalar_lea.vmem [#allocation7], %s332
          %334 = dma.done %s330, 1280
        $region48: #{tpu_custom_call.1} parent=43 // pred_fallthru
          _
      $region44: #{tpu_custom_call.1} parent=5 // pred_fallthru
        _
    $region6: #{tpu_custom_call.1} parent=1 // loop_footer
      %s19 = sadd.s32 1, %s15
    $region7: #{tpu_custom_call.1} parent=1 // loop_footer_branch
      %14 = sbr.rel target = $region3
    $region8: #{tpu_custom_call.1} parent=1 // loop_exit
      _
    %335 = vsyncpa [#allocation3], 1
    %s336 = scalar_lea.sflag [#allocation3], 1
    %337 = vsyncpa %s336, 1
    %338 = vsyncpa [#allocation6], 1
    %s339 = scalar_lea.sflag [#allocation6], 1
    %340 = vsyncpa %s339, 1
    %341 = vsyncpa [#allocation4], 1
    %s342 = scalar_lea.sflag [#allocation4], 1
    %343 = vsyncpa %s342, 1

</llo_original>
